<compile_context>
chip_gen: v5e
topology: v5e:2x2
jax: 0.10.0
libtpu: 0.0.40
codegen_flags: <defaults>
</compile_context>

<pallas_src>
import functools

import jax
import jax.numpy as jnp
from jax.experimental import pallas as pl
from jax.experimental.pallas import tpu as pltpu

_LANE = 128        # lane width: last-dim alignment for unmasked (lane-dense) stores
_SUBLANE = 8       # sublane width: second-to-last-dim alignment
_MIN_M_STEPS = 8   # aim for >= this many grid steps along M (>= 4 per v7x TensorCore)
_TN_SPLIT = 1536   # tile E only beyond this width (bounds the VMEM-resident weight tile)


def _round_up(x, m):
    return (x + m - 1) // m * m


@functools.lru_cache(maxsize=1)
def _tpu_config():
    """(tm_max, vmem_limit_cap) per TPU generation; cached, conservative fallback."""
    vmem_cap = 64 << 20
    try:
        vmem_cap = int(pltpu.get_tpu_info().vmem_capacity_bytes)
    except Exception:          # API unavailable / non-TPU context: conservative default
        pass
    if vmem_cap <= (64 << 20):     # v7x-class: 64 MiB per TensorCore
        return 512, 48 << 20       # leave headroom for compiler scratch / spill
    return 1024, 96 << 20          # v5e / v6e: 128 MiB physical VMEM


def _patch_embed_kernel(p_ref, w_ref, b_ref, o_ref):
    # p_ref: (tm, K)  w_ref: (K, tn)  b_ref: (1, tn) f32  o_ref: (tm, tn)
    acc = jnp.dot(p_ref[...], w_ref[...], preferred_element_type=jnp.float32)
    o_ref[...] = (acc + b_ref[...]).astype(o_ref.dtype)


@functools.partial(
    jax.jit,
    static_argnames=("patch_size", "use_bf16", "buffered_weights", "tm_max", "vmem_cap"))
def _patch_embed_impl(x, weight, bias, *, patch_size, use_bf16, buffered_weights,
                      tm_max, vmem_cap):
    B, C, H, W = x.shape
    ph, pw = patch_size
    E = weight.shape[0]
    assert H % ph == 0 and W % pw == 0, "image size must be divisible by patch size"
    gh, gw = H // ph, W // pw
    num_patches = gh * gw
    M = B * num_patches
    K = C * ph * pw
    out_dtype = x.dtype
    compute_dtype = jnp.bfloat16 if use_bf16 else x.dtype

    # --- im2col (wrapper-side XLA fusion; the bf16 cast is fused into the same fusion so
    #     the one extra HBM write is half-width).  K ordering is (c, kh, kw) to match the
    #     conv-weight reshape below. ---
    patches = x.reshape(B, C, gh, ph, gw, pw)
    patches = jnp.transpose(patches, (0, 2, 4, 1, 3, 5))
    patches = patches.reshape(M, K).astype(compute_dtype)

    w_mat = jnp.transpose(weight.reshape(E, K), (1, 0)).astype(compute_dtype)  # (K, E)
    b_mat = bias.reshape(1, E).astype(jnp.float32)                             # f32 bias add

    # --- tiling ---
    E_pad = _round_up(E, _LANE)            # lane-dense output stores
    tn = E_pad
    if E_pad > _TN_SPLIT:                  # bound the weight tile for very wide embeddings
        for cand in range(1024, _LANE - 1, -_LANE):
            if E_pad % cand == 0:
                tn = cand
                break

    tm = min(tm_max, _round_up(max(1, (M + _MIN_M_STEPS - 1) // _MIN_M_STEPS), _SUBLANE))
    tm = max(tm, _SUBLANE)

    p_sz = jnp.dtype(compute_dtype).itemsize
    o_sz = jnp.dtype(out_dtype).itemsize
    w_bufs = 1 if buffered_weights else 2

    def working_set(tm_):
        return (2 * tm_ * K * p_sz           # double-buffered patch tile
                + 2 * tm_ * tn * o_sz        # double-buffered output tile
                + w_bufs * K * tn * p_sz     # weight tile(s)
                + 2 * tn * 4)                # bias

    while tm > _SUBLANE and working_set(tm) > (3 * vmem_cap) // 4:
        tm = max(_SUBLANE, _round_up(tm // 2, _SUBLANE))

    M_pad = _round_up(M, tm)

    # --- pad only what needs padding ---
    if M_pad != M:
        patches = jnp.pad(patches, ((0, M_pad - M), (0, 0)))
    if E_pad != E:
        w_mat = jnp.pad(w_mat, ((0, 0), (0, E_pad - E)))
        b_mat = jnp.pad(b_mat, ((0, 0), (0, E_pad - E)))

    grid_m = M_pad // tm
    grid_n = E_pad // tn
    grid = (grid_n, grid_m)                 # E outer (weight-stationary), M inner

    vmem_limit = int(min(vmem_cap, max(32 << 20, 2 * working_set(tm))))

    cost = pl.CostEstimate(
        flops=2 * M_pad * K * E_pad,
        transcendentals=0,
        bytes_accessed=(M_pad * K * p_sz + K * E_pad * p_sz
                        + E_pad * 4 + M_pad * E_pad * o_sz),
    )

    # Constant-index weight/bias blocks are DMA'd once and reused by every grid step; the
    # only benefit of single-buffering them is one buffer's worth of VMEM, so apply it only
    # when the block index really is constant (grid_n == 1) and the cached probe passed.
    if buffered_weights and grid_n == 1:
        w_spec = pl.BlockSpec((K, tn), lambda n, m: (0, n), pipeline_mode=pl.Buffered(1))
        b_spec = pl.BlockSpec((1, tn), lambda n, m: (0, n), pipeline_mode=pl.Buffered(1))
    else:
        w_spec = pl.BlockSpec((K, tn), lambda n, m: (0, n))
        b_spec = pl.BlockSpec((1, tn), lambda n, m: (0, n))

    out = pl.pallas_call(
        _patch_embed_kernel,
        out_shape=jax.ShapeDtypeStruct((M_pad, E_pad), out_dtype),
        grid_spec=pltpu.PrefetchScalarGridSpec(
            num_scalar_prefetch=0,
            grid=grid,
            in_specs=[
                pl.BlockSpec((tm, K), lambda n, m: (m, 0)),
                w_spec,
                b_spec,
            ],
            out_specs=pl.BlockSpec((tm, tn), lambda n, m: (m, n)),
        ),
        compiler_params=pltpu.CompilerParams(
            dimension_semantics=("parallel", "parallel"),
            vmem_limit_bytes=vmem_limit,
            # Let XLA fuse the im2col(+cast) producer of `patches` into the kernel's input
            # pipeline when it is able to (harmless no-op otherwise).
            allow_input_fusion=[True, False, False],
        ),
        cost_estimate=cost,
    )(patches, w_mat, b_mat)

    # Slice back only the dims that were actually padded (no-op at production ViT shapes).
    if M_pad != M:
        out = out[:M]
    if E_pad != E:
        out = out[:, :E]
    return out.reshape(B, num_patches, E)


_BUFFERED_WEIGHTS_OK = None   # capability decision for pl.Buffered(1); set once, then cached


def patch_embed(x, weight, bias, patch_size, *, use_bf16=True):
    """x: (B, C, H, W) NCHW (PyTorch layout).  weight: (E, C, ph, pw) Conv2d weight.
    bias: (E,).  Returns (B, num_patches, E), matching PatchEmbed.forward."""
    global _BUFFERED_WEIGHTS_OK
    ps = tuple(int(p) for p in patch_size)
    tm_max, vmem_cap = _tpu_config()
    kwargs = dict(patch_size=ps, use_bf16=bool(use_bf16), tm_max=tm_max, vmem_cap=vmem_cap)
    if _BUFFERED_WEIGHTS_OK is None:
        try:
            out = _patch_embed_impl(x, weight, bias, buffered_weights=True, **kwargs)
            _BUFFERED_WEIGHTS_OK = True
            return out
        except Exception:
            # pl.Buffered(1) rejected by this jax version: decide once, never retry the
            # failing compile.  Any genuine (non-buffering) error re-raises below.
            _BUFFERED_WEIGHTS_OK = False
    return _patch_embed_impl(x, weight, bias, buffered_weights=_BUFFERED_WEIGHTS_OK, **kwargs)


if __name__ == "__main__":
    # Small shapes consistent with the module: 32x32 image, 4x4 patches, 4 input channels,
    # embed_dim 32.  M = B*num_patches = 2*64 = 128 -> 8 M-tiles of 16 rows (exercises the
    # tiled, multi-step grid); E = 32 -> padded to 128 for lane-dense stores, sliced back.
    # (Perf tuning conclusions should be drawn at production ViT shapes, not these.)
    B, C, H, W = 2, 4, 32, 32
    ph = pw = 4
    E = 32

    key = jax.random.PRNGKey(0)
    kx, kw_, kb = jax.random.split(key, 3)
    x = jax.random.normal(kx, (B, C, H, W), dtype=jnp.float32)
    weight = jax.random.normal(kw_, (E, C, ph, pw), dtype=jnp.float32) * 0.02
    bias = jax.random.normal(kb, (E,), dtype=jnp.float32) * 0.02

    # Reference: plain-JAX im2col matmul (same math as the PyTorch strided conv).
    gh, gw = H // ph, W // pw
    ref_p = jnp.transpose(x.reshape(B, C, gh, ph, gw, pw), (0, 2, 4, 1, 3, 5))
    ref_p = ref_p.reshape(B * gh * gw, C * ph * pw)
    ref = (ref_p @ weight.reshape(E, -1).T + bias).reshape(B, gh * gw, E)

    out_bf16 = jax.block_until_ready(patch_embed(x, weight, bias, (ph, pw)))                 # fast path
    out_f32 = jax.block_until_ready(patch_embed(x, weight, bias, (ph, pw), use_bf16=False))  # strict f32

    assert out_bf16.shape == (B, gh * gw, E), out_bf16.shape
    assert out_f32.shape == (B, gh * gw, E), out_f32.shape
    assert jnp.allclose(out_f32, ref, atol=1e-4, rtol=1e-4), "f32 path mismatch vs reference"
    assert jnp.allclose(out_bf16, ref, atol=2e-2, rtol=2e-2), "bf16 path mismatch vs reference"

    print("KERNEL_OK")
</pallas_src>

<mosaic_0001>
module attributes {stable_mosaic.version = 11 : i64} {
  func.func @_patch_embed_kernel(%arg0: i32, %arg1: i32, %arg2: memref<16x64xbf16, #tpu.memory_space<vmem>>, %arg3: memref<64x128xbf16, #tpu.memory_space<vmem>>, %arg4: memref<1x128xf32, #tpu.memory_space<vmem>>, %arg5: memref<16x128xf32, #tpu.memory_space<vmem>>) attributes {dimension_semantics = [#tpu.dimension_semantics<parallel>, #tpu.dimension_semantics<parallel>], iteration_bounds = array<i64: 1, 8>, scalar_prefetch = 0 : i64, scratch_operands = 0 : i64, tpu.core_type = #tpu.core_type<tc>, window_params = [{transform_indices = @transform_0, window_bounds = array<i64: 16, 64>}, {pipeline_mode = #tpu.pipeline_mode<synchronous>, transform_indices = @transform_1, window_bounds = array<i64: 64, 128>}, {pipeline_mode = #tpu.pipeline_mode<synchronous>, transform_indices = @transform_2, window_bounds = array<i64: 1, 128>}, {transform_indices = @transform_3, window_bounds = array<i64: 16, 128>}]} {
    %c0 = arith.constant 0 : index
    %c0_0 = arith.constant 0 : index
    %0 = vector.load %arg2[%c0, %c0_0] : memref<16x64xbf16, #tpu.memory_space<vmem>>, vector<16x64xbf16>
    %c0_1 = arith.constant 0 : index
    %c0_2 = arith.constant 0 : index
    %1 = vector.load %arg3[%c0_1, %c0_2] : memref<64x128xbf16, #tpu.memory_space<vmem>>, vector<64x128xbf16>
    %cst = arith.constant dense<0.000000e+00> : vector<16x128xf32>
    %2 = tpu.matmul %0, %1, %cst {dimension_numbers = #tpu.dot_dimension_numbers<[1], [0], [0], [1], [0, 0, 1, 1], [], []>} : vector<16x64xbf16>, vector<64x128xbf16>, vector<16x128xf32> -> vector<16x128xf32>
    %c0_3 = arith.constant 0 : index
    %c0_4 = arith.constant 0 : index
    %3 = vector.load %arg4[%c0_3, %c0_4] : memref<1x128xf32, #tpu.memory_space<vmem>>, vector<1x128xf32>
    %4 = vector.broadcast %3 : vector<1x128xf32> to vector<16x128xf32>
    %5 = arith.addf %2, %4 : vector<16x128xf32>
    %c0_5 = arith.constant 0 : index
    %c0_6 = arith.constant 0 : index
    %6 = vector.load %arg5[%c0_5, %c0_6] : memref<16x128xf32, #tpu.memory_space<vmem>>, vector<16x128xf32>
    tpu.vector_store %arg5[%c0_5, %c0_6], %5 {strides = array<i32>} : memref<16x128xf32, #tpu.memory_space<vmem>>, vector<16x128xf32>,
    return
  }
  func.func @transform_0(%arg0: i32, %arg1: i32) -> (i32, i32) {
    %c0_i32 = arith.constant 0 : i32
    %c0_i32_0 = arith.constant 0 : i32
    return %arg1, %c0_i32 : i32, i32
  }
  func.func @transform_1(%arg0: i32, %arg1: i32) -> (i32, i32) {
    %c0_i32 = arith.constant 0 : i32
    %c0_i32_0 = arith.constant 0 : i32
    return %c0_i32, %arg0 : i32, i32
  }
  func.func @transform_2(%arg0: i32, %arg1: i32) -> (i32, i32) {
    %c0_i32 = arith.constant 0 : i32
    %c0_i32_0 = arith.constant 0 : i32
    return %c0_i32, %arg0 : i32, i32
  }
  func.func @transform_3(%arg0: i32, %arg1: i32) -> (i32, i32) {
    %c0_i32 = arith.constant 0 : i32
    return %arg1, %arg0 : i32, i32
  }
}

module attributes {stable_mosaic.version = 11 : i64} {
  func.func @_patch_embed_kernel(%arg0: i32, %arg1: i32, %arg2: memref<16x64xbf16, #tpu.memory_space<vmem>>, %arg3: memref<64x128xbf16, #tpu.memory_space<vmem>>, %arg4: memref<1x128xf32, #tpu.memory_space<vmem>>, %arg5: memref<16x128xf32, #tpu.memory_space<vmem>>) attributes {dimension_semantics = [#tpu.dimension_semantics<parallel>, #tpu.dimension_semantics<parallel>], iteration_bounds = array<i64: 1, 8>, scalar_prefetch = 0 : i64, scratch_operands = 0 : i64, tpu.core_type = #tpu.core_type<tc>, window_params = [{transform_indices = @transform_0, window_bounds = array<i64: 16, 64>}, {transform_indices = @transform_1, window_bounds = array<i64: 64, 128>}, {transform_indices = @transform_2, window_bounds = array<i64: 1, 128>}, {transform_indices = @transform_3, window_bounds = array<i64: 16, 128>}]} {
    %c0 = arith.constant 0 : index
    %c0_0 = arith.constant 0 : index
    %0 = vector.load %arg2[%c0, %c0_0] : memref<16x64xbf16, #tpu.memory_space<vmem>>, vector<16x64xbf16>
    %c0_1 = arith.constant 0 : index
    %c0_2 = arith.constant 0 : index
    %1 = vector.load %arg3[%c0_1, %c0_2] : memref<64x128xbf16, #tpu.memory_space<vmem>>, vector<64x128xbf16>
    %cst = arith.constant dense<0.000000e+00> : vector<16x128xf32>
    %2 = tpu.matmul %0, %1, %cst {dimension_numbers = #tpu.dot_dimension_numbers<[1], [0], [0], [1], [0, 0, 1, 1], [], []>} : vector<16x64xbf16>, vector<64x128xbf16>, vector<16x128xf32> -> vector<16x128xf32>
    %c0_3 = arith.constant 0 : index
    %c0_4 = arith.constant 0 : index
    %3 = vector.load %arg4[%c0_3, %c0_4] : memref<1x128xf32, #tpu.memory_space<vmem>>, vector<1x128xf32>
    %4 = vector.broadcast %3 : vector<1x128xf32> to vector<16x128xf32>
    %5 = arith.addf %2, %4 : vector<16x128xf32>
    %c0_5 = arith.constant 0 : index
    %c0_6 = arith.constant 0 : index
    %6 = vector.load %arg5[%c0_5, %c0_6] : memref<16x128xf32, #tpu.memory_space<vmem>>, vector<16x128xf32>
    tpu.vector_store %arg5[%c0_5, %c0_6], %5 {strides = array<i32>} : memref<16x128xf32, #tpu.memory_space<vmem>>, vector<16x128xf32>,
    return
  }
  func.func @transform_0(%arg0: i32, %arg1: i32) -> (i32, i32) {
    %c0_i32 = arith.constant 0 : i32
    %c0_i32_0 = arith.constant 0 : i32
    return %arg1, %c0_i32 : i32, i32
  }
  func.func @transform_1(%arg0: i32, %arg1: i32) -> (i32, i32) {
    %c0_i32 = arith.constant 0 : i32
    %c0_i32_0 = arith.constant 0 : i32
    return %c0_i32, %arg0 : i32, i32
  }
  func.func @transform_2(%arg0: i32, %arg1: i32) -> (i32, i32) {
    %c0_i32 = arith.constant 0 : i32
    %c0_i32_0 = arith.constant 0 : i32
    return %c0_i32, %arg0 : i32, i32
  }
  func.func @transform_3(%arg0: i32, %arg1: i32) -> (i32, i32) {
    %c0_i32 = arith.constant 0 : i32
    return %arg1, %arg0 : i32, i32
  }
}

</mosaic_0001>

<llo_original>
// kernel: _patch_embed_impl.1
$region0: #{_patch_embed_impl.1}
  #allocation0 [shape = 'u32[]', space=smem, size = 0x4, offset = 0x4, fixed_abs, tag = 'smem constant byte address 0x4 - core index']
  #allocation1 [shape = 'u32[72,128]{1,0:T(1,128)}', space=vmem, size = 0x9000, scoped, tag = 'internal scratch']
  %s0 = inlined_call_operand.vmem [shape: bf16[128,64], index: 0, kind: input, shape index: {}]
  %s1 = inlined_call_operand.vmem [shape: bf16[64,128], index: 1, kind: input, shape index: {}]
  %s2 = inlined_call_operand.vmem [shape: f32[1,128], index: 2, kind: input, shape index: {}]
  %s3 = inlined_call_operand.vmem [shape: f32[128,128], index: 3, kind: output, shape index: {}]
  %s4 = sld [smem:[#allocation0]]
  $region45: #{_patch_embed_impl.1} parent=0
    _
  %s6 = ssub.s32 1, %s4
  %s7 = scalar_select 0, %s6, %s4
  loop: start=0, step=1, limit=10
  $region2: #{_patch_embed_impl.1} parent=0 // loop_pre_header
    _
  $region3: #{_patch_embed_impl.1} parent=0 // loop_header
    %s9 = sphi 0, %s13
    %p10 = scmp.ge.s32.totalorder %s9, 10
    %s16 = sphi 0, %s28
    %s17 = sphi 0, %s24
    %s18 = sphi 0, %s16
    %s19 = sphi 0, %s17
    %s20 = sphi 0, %s18
    %s21 = sphi 0, %s19
    %s31 = sphi 0, %s33
    %s34 = sphi 0, %s31
    %s35 = sphi 0, %s34
    %s51 = sphi 0, %s35
    %s57 = sphi 0, %s59
    %s60 = sphi 0, %s57
    %s61 = sphi 0, %s60
    %s77 = sphi 0, %s61
    %s83 = sphi 0, %s85
    %s86 = sphi 0, %s83
    %s87 = sphi 0, %s86
    %s103 = sphi 0, %s87
    %s111 = sphi 0, %s113
    %s114 = sphi 0, %s111
    %s115 = sphi 0, %s114
    %s131 = sphi 0, %s115
  $region4: #{_patch_embed_impl.1} parent=0 // loop_header_branch
    %12 = sbr.rel (%p10) target = $region8
  $region5: #{_patch_embed_impl.1} parent=0 // loop_body
    %s14 = ssub.s32 %s9, 1
    %s15 = ssub.s32 %s9, 2
    %s22 = sadd.s32 1, %s17
    %p23 = scmp.ge.s32.totalorder %s22, 8
    %s24 = scalar_select %p23, 0, %s22
    %s25 = sadd.s32 1, %s16
    %s26 = scalar_select %p23, %s25, %s16
    %p27 = scmp.ge.s32.totalorder %s26, 1
    %s28 = scalar_select %p27, 0, %s26
    %s29 = ssub.s32 %s17, %s24
    %p30 = scmp.eq.s32.totalorder %s29, 0
    %s32 = sadd.s32 %s31, 1
    %s33 = scalar_select %p30, %s31, %s32
    %p36 = pneg %p30
    %p37 = scmp.eq.s32.totalorder %s9, 7
    %p38 = por %p36, %p37
    %p39 = scmp.ne.s32.totalorder %s31, %s34
    %p40 = scmp.eq.s32.totalorder %s9, 0
    %p41 = por %p39, %p40
    %p42 = scmp.ne.s32.totalorder %s31, %s34
    %p43 = scmp.eq.s32.totalorder %s14, 7
    %p44 = por %p42, %p43
    %p45 = scmp.ne.s32.totalorder %s34, %s35
    %p46 = scmp.eq.s32.totalorder %s14, 0
    %p47 = por %p45, %p46
    %p48 = scmp.ne.s32.totalorder %s34, %s35
    %p49 = scmp.eq.s32.totalorder %s15, 7
    %p50 = por %p48, %p49
    %p52 = scmp.ne.s32.totalorder %s35, %s51
    %p53 = scmp.eq.s32.totalorder %s15, 0
    %p54 = por %p52, %p53
    %s55 = ssub.s32 %s16, %s28
    %p56 = scmp.eq.s32.totalorder %s55, 0
    %s58 = sadd.s32 %s57, 1
    %s59 = scalar_select %p56, %s57, %s58
    %p62 = pneg %p56
    %p63 = scmp.eq.s32.totalorder %s9, 7
    %p64 = por %p62, %p63
    %p65 = scmp.ne.s32.totalorder %s57, %s60
    %p66 = scmp.eq.s32.totalorder %s9, 0
    %p67 = por %p65, %p66
    %p68 = scmp.ne.s32.totalorder %s57, %s60
    %p69 = scmp.eq.s32.totalorder %s14, 7
    %p70 = por %p68, %p69
    %p71 = scmp.ne.s32.totalorder %s60, %s61
    %p72 = scmp.eq.s32.totalorder %s14, 0
    %p73 = por %p71, %p72
    %p74 = scmp.ne.s32.totalorder %s60, %s61
    %p75 = scmp.eq.s32.totalorder %s15, 7
    %p76 = por %p74, %p75
    %p78 = scmp.ne.s32.totalorder %s61, %s77
    %p79 = scmp.eq.s32.totalorder %s15, 0
    %p80 = por %p78, %p79
    %s81 = ssub.s32 %s16, %s28
    %p82 = scmp.eq.s32.totalorder %s81, 0
    %s84 = sadd.s32 %s83, 1
    %s85 = scalar_select %p82, %s83, %s84
    %p88 = pneg %p82
    %p89 = scmp.eq.s32.totalorder %s9, 7
    %p90 = por %p88, %p89
    %p91 = scmp.ne.s32.totalorder %s83, %s86
    %p92 = scmp.eq.s32.totalorder %s9, 0
    %p93 = por %p91, %p92
    %p94 = scmp.ne.s32.totalorder %s83, %s86
    %p95 = scmp.eq.s32.totalorder %s14, 7
    %p96 = por %p94, %p95
    %p97 = scmp.ne.s32.totalorder %s86, %s87
    %p98 = scmp.eq.s32.totalorder %s14, 0
    %p99 = por %p97, %p98
    %p100 = scmp.ne.s32.totalorder %s86, %s87
    %p101 = scmp.eq.s32.totalorder %s15, 7
    %p102 = por %p100, %p101
    %p104 = scmp.ne.s32.totalorder %s87, %s103
    %p105 = scmp.eq.s32.totalorder %s15, 0
    %p106 = por %p104, %p105
    %s107 = ssub.s32 %s17, %s24
    %s108 = ssub.s32 %s16, %s28
    %s109 = sor.u32 %s107, %s108
    %p110 = scmp.eq.s32.totalorder %s109, 0
    %s112 = sadd.s32 %s111, 1
    %s113 = scalar_select %p110, %s111, %s112
    %p116 = pneg %p110
    %p117 = scmp.eq.s32.totalorder %s9, 7
    %p118 = por %p116, %p117
    %p119 = scmp.ne.s32.totalorder %s111, %s114
    %p120 = scmp.eq.s32.totalorder %s9, 0
    %p121 = por %p119, %p120
    %p122 = scmp.ne.s32.totalorder %s111, %s114
    %p123 = scmp.eq.s32.totalorder %s14, 7
    %p124 = por %p122, %p123
    %p125 = scmp.ne.s32.totalorder %s114, %s115
    %p126 = scmp.eq.s32.totalorder %s14, 0
    %p127 = por %p125, %p126
    %p128 = scmp.ne.s32.totalorder %s114, %s115
    %p129 = scmp.eq.s32.totalorder %s15, 7
    %p130 = por %p128, %p129
    %p132 = scmp.ne.s32.totalorder %s115, %s131
    %p133 = scmp.eq.s32.totalorder %s15, 0
    %p134 = por %p132, %p133
    %p135 = scmp.le.s32.totalorder 1, %s9
    %p136 = scmp.lt.s32.totalorder %s9, 9
    %p137 = pnand %p135, %p136
    %p138 = pneg %p137
    // Predicated region
    $region9: #{_patch_embed_impl.1} parent=5 // pred_check
      _
    $region10: #{_patch_embed_impl.1} parent=5 // pred_check_branch
      %140 = sbr.rel (%p137) target = $region12
    $region11: #{_patch_embed_impl.1} parent=5 // pred_region
      %s141 = ssub.s32 %s9, 1
      // Predicated region
      $region13: #{_patch_embed_impl.1} parent=11 // pred_check
        %p142 = pneg %p73
      $region14: #{_patch_embed_impl.1} parent=11 // pred_check_branch
        %144 = sbr.rel (%p142) target = $region16
      $region15: #{_patch_embed_impl.1} parent=11 // pred_region
        %p145 = scmp.lt.s32.totalorder %s18, 0
        %s146 = scalar_select %p145, %s18, 0
        %s147 = smul.addr %s146, 4
        %s148 = scalar_lea.vmem %s1, %s147
      $region16: #{_patch_embed_impl.1} parent=11 // pred_fallthru
        _
      // Predicated region
      $region17: #{_patch_embed_impl.1} parent=11 // pred_check
        %p149 = pneg %p99
      $region18: #{_patch_embed_impl.1} parent=11 // pred_check_branch
        %151 = sbr.rel (%p149) target = $region20
      $region19: #{_patch_embed_impl.1} parent=11 // pred_region
        %p152 = scmp.lt.s32.totalorder %s18, 0
        %s153 = scalar_select %p152, %s18, 0
        %s154 = scalar_lea.vmem %s2, %s153
      $region20: #{_patch_embed_impl.1} parent=11 // pred_fallthru
        _
    $region12: #{_patch_embed_impl.1} parent=5 // pred_fallthru
      _
    %p155 = scmp.lt.s32.totalorder %s9, 8
    // Predicated region
    $region21: #{_patch_embed_impl.1} parent=5 // pred_check
      %p156 = pneg %p155
    $region22: #{_patch_embed_impl.1} parent=5 // pred_check_branch
      %158 = sbr.rel (%p156) target = $region24
    $region23: #{_patch_embed_impl.1} parent=5 // pred_region
      // Predicated region
      $region25: #{_patch_embed_impl.1} parent=23 // pred_check
        %p159 = pneg %p41
      $region26: #{_patch_embed_impl.1} parent=23 // pred_check_branch
        %161 = sbr.rel (%p159) target = $region28
      $region27: #{_patch_embed_impl.1} parent=23 // pred_region
        %s162 = smul.u32 2, %s17
        %p163 = scmp.lt.s32.totalorder %s162, 15
        %s164 = scalar_select %p163, %s162, 15
        %s165 = smul.addr %s164, 4
        %s166 = scalar_lea.vmem %s0, %s165
        %s167 = smul.u32 2, %s17
      $region28: #{_patch_embed_impl.1} parent=23 // pred_fallthru
        _
    $region24: #{_patch_embed_impl.1} parent=5 // pred_fallthru
      _
    %p168 = scmp.le.s32.totalorder 1, %s9
    %p169 = scmp.lt.s32.totalorder %s9, 9
    %p170 = pnand %p168, %p169
    %p171 = pneg %p170
    // Predicated region
    $region29: #{_patch_embed_impl.1} parent=5 // pred_check
      _
    $region30: #{_patch_embed_impl.1} parent=5 // pred_check_branch
      %173 = sbr.rel (%p170) target = $region32
    $region31: #{_patch_embed_impl.1} parent=5 // pred_region
      %s174 = ssub.s32 %s9, 1
      %s175 = smul.u32 2, %s19
      %p176 = scmp.lt.s32.totalorder %s175, 15
      %s177 = scalar_select %p176, %s175, 15
      %s178 = smul.addr %s177, 4
      %s179 = scalar_lea.vmem %s0, %s178
      %p180 = pneg %p47
      %p181 = pneg %p44
      %p182 = scmp.lt.s32.totalorder %s18, 0
      %s183 = scalar_select %p182, %s18, 0
      %s184 = smul.addr %s183, 4
      %s185 = scalar_lea.vmem %s1, %s184
      %p186 = pneg %p73
      %p187 = pneg %p70
      %p188 = scmp.lt.s32.totalorder %s18, 0
      %s189 = scalar_select %p188, %s18, 0
      %s190 = scalar_lea.vmem %s2, %s189
      %p191 = pneg %p99
      %p192 = pneg %p96
      %p193 = pneg %p127
      %p194 = pneg %p124
      %s195 = smul.u32 2, %s19
      %p196 = scmp.lt.s32.totalorder %s195, 15
      %s197 = scalar_select %p196, %s195, 15
      %p198 = scmp.lt.s32.totalorder %s18, 0
      %s199 = scalar_select %p198, %s18, 0
      %s200 = sadd.s32 %s199, %s197
      %s201 = smul.addr %s200, 8
      %s202 = scalar_lea.vmem %s3, %s201
      %s203 = smul.u32 2, %s19
      %p204 = scmp.lt.s32.totalorder %s203, 15
      %s205 = scalar_select %p204, %s203, 15
      %s206 = smul.addr %s205, 4
      %s207 = scalar_lea.vmem %s0, %s206
      %s208 = smul.u32 2, %s19
      %p209 = scmp.lt.s32.totalorder %s18, 0
      %s210 = scalar_select %p209, %s18, 0
      %s211 = smul.addr %s210, 4
      %s212 = scalar_lea.vmem %s1, %s211
      %p213 = scmp.lt.s32.totalorder %s18, 0
      %s214 = scalar_select %p213, %s18, 0
      %s215 = scalar_lea.vmem %s2, %s214
      %s216 = smul.u32 2, %s19
      %p217 = scmp.lt.s32.totalorder %s216, 15
      %s218 = scalar_select %p217, %s216, 15
      %p219 = scmp.lt.s32.totalorder %s18, 0
      %s220 = scalar_select %p219, %s18, 0
      %s221 = sadd.s32 %s220, %s218
      %s222 = smul.addr %s221, 8
      %s223 = scalar_lea.vmem %s3, %s222
      %s224 = smul.u32 2, %s19
      %v226 = vld [vmem:[%s207] sm:$0xf]
      %v227 = vld [vmem:[%s207 + $0x4] sm:$0xf]
      %v228 = vld [vmem:[%s212] sm:$0xf]
      %v229 = vld [vmem:[%s212 + $0x4] sm:$0xf]
      %v230 = vld [vmem:[%s212 + $0x8] sm:$0xf]
      %v231 = vld [vmem:[%s212 + $0xc] sm:$0xf]
      %v232 = vld [vmem:[%s212 + $0x10] sm:$0xf]
      %v233 = vld [vmem:[%s212 + $0x14] sm:$0xf]
      %v234 = vld [vmem:[%s212 + $0x18] sm:$0xf]
      %v235 = vld [vmem:[%s212 + $0x1c] sm:$0xf]
      %v236 = vld [vmem:[%s215] sm:$0x1]
      %v238 = vperm.slane %v236, 0
      %v242 = vunpack.c.l.b16 %v226
      %v243 = vunpack.c.l.b16 %v227
      %v244 = vpack.c.b16 %v243, %v242
      %v253 = vunpack.c.l.b16 %v228
      %v254 = vunpack.c.l.b16 %v229
      %v255 = vunpack.c.l.b16 %v230
      %v256 = vunpack.c.l.b16 %v231
      %v257 = vunpack.c.l.b16 %v232
      %v258 = vunpack.c.l.b16 %v233
      %v259 = vunpack.c.l.b16 %v234
      %v260 = vunpack.c.l.b16 %v235
      %v261 = vpack.c.b16 %v254, %v253
      %v262 = vpack.c.b16 %v256, %v255
      %v263 = vpack.c.b16 %v258, %v257
      %v264 = vpack.c.b16 %v260, %v259
      %vm269 = vcmask 523264
      %v271 = vsel %vm269, %v244, 0
      %273 = vmatpush.bf16.msra.mxu0 0
      %274 = vmatpush.bf16.msra.mxu0 0
      %275 = vmatpush.bf16.msra.mxu0 0
      %276 = vmatpush.bf16.msra.mxu0 0
      %277 = vmatpush.bf16.msra.mxu0 %v264
      %278 = vmatpush.bf16.msra.mxu0 %v263
      %279 = vmatpush.bf16.msra.mxu0 %v262
      %280 = vmatpush.bf16.msra.mxu0 %v261
      %281 = vmatmul.bf16.gmra.mxu0 %v271
      %v282 = vpop.f32.mrf.mxu0
      %v283 = vadd.f32 %v238, %v282
      %v284 = vpop.f32.mrf.mxu0
      %v285 = vadd.f32 %v238, %v284
      %286 = vdwg.mxu0
      %287 = vst [vmem:[%s223] sm:$0xff] %v283
      %288 = vst [vmem:[%s223 + $0x8] sm:$0xff] %v285
      %s289 = smul.u32 2, %s19
      %p290 = scmp.lt.s32.totalorder %s289, 15
      %s291 = scalar_select %p290, %s289, 15
      %p292 = scmp.lt.s32.totalorder %s18, 0
      %s293 = scalar_select %p292, %s18, 0
      %s294 = sadd.s32 %s293, %s291
      %s295 = smul.addr %s294, 8
      %s296 = scalar_lea.vmem %s3, %s295
      // Predicated region
      $region33: #{_patch_embed_impl.1} parent=31 // pred_check
        %p297 = pneg %p124
      $region34: #{_patch_embed_impl.1} parent=31 // pred_check_branch
        %299 = sbr.rel (%p297) target = $region36
      $region35: #{_patch_embed_impl.1} parent=31 // pred_region
        %s300 = smul.u32 2, %s19
      $region36: #{_patch_embed_impl.1} parent=31 // pred_fallthru
        _
    $region32: #{_patch_embed_impl.1} parent=5 // pred_fallthru
      _
    %p301 = scmp.le.s32.totalorder 2, %s9
    // Predicated region
    $region37: #{_patch_embed_impl.1} parent=5 // pred_check
      %p302 = pneg %p301
    $region38: #{_patch_embed_impl.1} parent=5 // pred_check_branch
      %304 = sbr.rel (%p302) target = $region40
    $region39: #{_patch_embed_impl.1} parent=5 // pred_region
      %s305 = ssub.s32 %s9, 2
      // Predicated region
      $region41: #{_patch_embed_impl.1} parent=39 // pred_check
        %p306 = pneg %p130
      $region42: #{_patch_embed_impl.1} parent=39 // pred_check_branch
        %308 = sbr.rel (%p306) target = $region44
      $region43: #{_patch_embed_impl.1} parent=39 // pred_region
        %s309 = smul.u32 2, %s21
        %p310 = scmp.lt.s32.totalorder %s309, 15
        %s311 = scalar_select %p310, %s309, 15
        %p312 = scmp.lt.s32.totalorder %s20, 0
        %s313 = scalar_select %p312, %s20, 0
        %s314 = sadd.s32 %s313, %s311
        %s315 = smul.addr %s314, 8
        %s316 = scalar_lea.vmem %s3, %s315
      $region44: #{_patch_embed_impl.1} parent=39 // pred_fallthru
        _
    $region40: #{_patch_embed_impl.1} parent=5 // pred_fallthru
      _
  $region6: #{_patch_embed_impl.1} parent=0 // loop_footer
    %s13 = sadd.s32 1, %s9
  $region7: #{_patch_embed_impl.1} parent=0 // loop_footer_branch
    %8 = sbr.rel target = $region3
  $region8: #{_patch_embed_impl.1} parent=0 // loop_exit
    _

// kernel: _patch_embed_impl.1
$region0: #{_patch_embed_impl.1}
  #allocation0 [shape = 'u32[]', space=smem, size = 0x4, offset = 0x4, fixed_abs, tag = 'smem constant byte address 0x4 - core index']
  #allocation1 [shape = 'u32[72,128]{1,0:T(1,128)}', space=vmem, size = 0x9000, scoped, tag = 'internal scratch']
  %s0 = inlined_call_operand.vmem [shape: bf16[128,64], index: 0, kind: input, shape index: {}]
  %s1 = inlined_call_operand.vmem [shape: bf16[64,128], index: 1, kind: input, shape index: {}]
  %s2 = inlined_call_operand.vmem [shape: f32[1,128], index: 2, kind: input, shape index: {}]
  %s3 = inlined_call_operand.vmem [shape: f32[128,128], index: 3, kind: output, shape index: {}]
  %s4 = sld [smem:[#allocation0]]
  $region45: #{_patch_embed_impl.1} parent=0
    _
  %s6 = ssub.s32 1, %s4
  %s7 = scalar_select 0, %s6, %s4
  loop: start=0, step=1, limit=10
  $region2: #{_patch_embed_impl.1} parent=0 // loop_pre_header
    _
  $region3: #{_patch_embed_impl.1} parent=0 // loop_header
    %s9 = sphi 0, %s13
    %p10 = scmp.ge.s32.totalorder %s9, 10
    %s16 = sphi 0, %s28
    %s17 = sphi 0, %s24
    %s18 = sphi 0, %s16
    %s19 = sphi 0, %s17
    %s20 = sphi 0, %s18
    %s21 = sphi 0, %s19
    %s31 = sphi 0, %s33
    %s34 = sphi 0, %s31
    %s35 = sphi 0, %s34
    %s51 = sphi 0, %s35
    %s57 = sphi 0, %s59
    %s60 = sphi 0, %s57
    %s61 = sphi 0, %s60
    %s77 = sphi 0, %s61
    %s83 = sphi 0, %s85
    %s86 = sphi 0, %s83
    %s87 = sphi 0, %s86
    %s103 = sphi 0, %s87
    %s111 = sphi 0, %s113
    %s114 = sphi 0, %s111
    %s115 = sphi 0, %s114
    %s131 = sphi 0, %s115
  $region4: #{_patch_embed_impl.1} parent=0 // loop_header_branch
    %12 = sbr.rel (%p10) target = $region8
  $region5: #{_patch_embed_impl.1} parent=0 // loop_body
    %s14 = ssub.s32 %s9, 1
    %s15 = ssub.s32 %s9, 2
    %s22 = sadd.s32 1, %s17
    %p23 = scmp.ge.s32.totalorder %s22, 8
    %s24 = scalar_select %p23, 0, %s22
    %s25 = sadd.s32 1, %s16
    %s26 = scalar_select %p23, %s25, %s16
    %p27 = scmp.ge.s32.totalorder %s26, 1
    %s28 = scalar_select %p27, 0, %s26
    %s29 = ssub.s32 %s17, %s24
    %p30 = scmp.eq.s32.totalorder %s29, 0
    %s32 = sadd.s32 %s31, 1
    %s33 = scalar_select %p30, %s31, %s32
    %p36 = pneg %p30
    %p37 = scmp.eq.s32.totalorder %s9, 7
    %p38 = por %p36, %p37
    %p39 = scmp.ne.s32.totalorder %s31, %s34
    %p40 = scmp.eq.s32.totalorder %s9, 0
    %p41 = por %p39, %p40
    %p42 = scmp.ne.s32.totalorder %s31, %s34
    %p43 = scmp.eq.s32.totalorder %s14, 7
    %p44 = por %p42, %p43
    %p45 = scmp.ne.s32.totalorder %s34, %s35
    %p46 = scmp.eq.s32.totalorder %s14, 0
    %p47 = por %p45, %p46
    %p48 = scmp.ne.s32.totalorder %s34, %s35
    %p49 = scmp.eq.s32.totalorder %s15, 7
    %p50 = por %p48, %p49
    %p52 = scmp.ne.s32.totalorder %s35, %s51
    %p53 = scmp.eq.s32.totalorder %s15, 0
    %p54 = por %p52, %p53
    %s55 = ssub.s32 %s16, %s28
    %p56 = scmp.eq.s32.totalorder %s55, 0
    %s58 = sadd.s32 %s57, 1
    %s59 = scalar_select %p56, %s57, %s58
    %p62 = pneg %p56
    %p63 = scmp.eq.s32.totalorder %s9, 7
    %p64 = por %p62, %p63
    %p65 = scmp.ne.s32.totalorder %s57, %s60
    %p66 = scmp.eq.s32.totalorder %s9, 0
    %p67 = por %p65, %p66
    %p68 = scmp.ne.s32.totalorder %s57, %s60
    %p69 = scmp.eq.s32.totalorder %s14, 7
    %p70 = por %p68, %p69
    %p71 = scmp.ne.s32.totalorder %s60, %s61
    %p72 = scmp.eq.s32.totalorder %s14, 0
    %p73 = por %p71, %p72
    %p74 = scmp.ne.s32.totalorder %s60, %s61
    %p75 = scmp.eq.s32.totalorder %s15, 7
    %p76 = por %p74, %p75
    %p78 = scmp.ne.s32.totalorder %s61, %s77
    %p79 = scmp.eq.s32.totalorder %s15, 0
    %p80 = por %p78, %p79
    %s81 = ssub.s32 %s16, %s28
    %p82 = scmp.eq.s32.totalorder %s81, 0
    %s84 = sadd.s32 %s83, 1
    %s85 = scalar_select %p82, %s83, %s84
    %p88 = pneg %p82
    %p89 = scmp.eq.s32.totalorder %s9, 7
    %p90 = por %p88, %p89
    %p91 = scmp.ne.s32.totalorder %s83, %s86
    %p92 = scmp.eq.s32.totalorder %s9, 0
    %p93 = por %p91, %p92
    %p94 = scmp.ne.s32.totalorder %s83, %s86
    %p95 = scmp.eq.s32.totalorder %s14, 7
    %p96 = por %p94, %p95
    %p97 = scmp.ne.s32.totalorder %s86, %s87
    %p98 = scmp.eq.s32.totalorder %s14, 0
    %p99 = por %p97, %p98
    %p100 = scmp.ne.s32.totalorder %s86, %s87
    %p101 = scmp.eq.s32.totalorder %s15, 7
    %p102 = por %p100, %p101
    %p104 = scmp.ne.s32.totalorder %s87, %s103
    %p105 = scmp.eq.s32.totalorder %s15, 0
    %p106 = por %p104, %p105
    %s107 = ssub.s32 %s17, %s24
    %s108 = ssub.s32 %s16, %s28
    %s109 = sor.u32 %s107, %s108
    %p110 = scmp.eq.s32.totalorder %s109, 0
    %s112 = sadd.s32 %s111, 1
    %s113 = scalar_select %p110, %s111, %s112
    %p116 = pneg %p110
    %p117 = scmp.eq.s32.totalorder %s9, 7
    %p118 = por %p116, %p117
    %p119 = scmp.ne.s32.totalorder %s111, %s114
    %p120 = scmp.eq.s32.totalorder %s9, 0
    %p121 = por %p119, %p120
    %p122 = scmp.ne.s32.totalorder %s111, %s114
    %p123 = scmp.eq.s32.totalorder %s14, 7
    %p124 = por %p122, %p123
    %p125 = scmp.ne.s32.totalorder %s114, %s115
    %p126 = scmp.eq.s32.totalorder %s14, 0
    %p127 = por %p125, %p126
    %p128 = scmp.ne.s32.totalorder %s114, %s115
    %p129 = scmp.eq.s32.totalorder %s15, 7
    %p130 = por %p128, %p129
    %p132 = scmp.ne.s32.totalorder %s115, %s131
    %p133 = scmp.eq.s32.totalorder %s15, 0
    %p134 = por %p132, %p133
    %p135 = scmp.le.s32.totalorder 1, %s9
    %p136 = scmp.lt.s32.totalorder %s9, 9
    %p137 = pnand %p135, %p136
    %p138 = pneg %p137
    // Predicated region
    $region9: #{_patch_embed_impl.1} parent=5 // pred_check
      _
    $region10: #{_patch_embed_impl.1} parent=5 // pred_check_branch
      %140 = sbr.rel (%p137) target = $region12
    $region11: #{_patch_embed_impl.1} parent=5 // pred_region
      %s141 = ssub.s32 %s9, 1
      // Predicated region
      $region13: #{_patch_embed_impl.1} parent=11 // pred_check
        %p142 = pneg %p73
      $region14: #{_patch_embed_impl.1} parent=11 // pred_check_branch
        %144 = sbr.rel (%p142) target = $region16
      $region15: #{_patch_embed_impl.1} parent=11 // pred_region
        %p145 = scmp.lt.s32.totalorder %s18, 0
        %s146 = scalar_select %p145, %s18, 0
        %s147 = smul.addr %s146, 4
        %s148 = scalar_lea.vmem %s1, %s147
      $region16: #{_patch_embed_impl.1} parent=11 // pred_fallthru
        _
      // Predicated region
      $region17: #{_patch_embed_impl.1} parent=11 // pred_check
        %p149 = pneg %p99
      $region18: #{_patch_embed_impl.1} parent=11 // pred_check_branch
        %151 = sbr.rel (%p149) target = $region20
      $region19: #{_patch_embed_impl.1} parent=11 // pred_region
        %p152 = scmp.lt.s32.totalorder %s18, 0
        %s153 = scalar_select %p152, %s18, 0
        %s154 = scalar_lea.vmem %s2, %s153
      $region20: #{_patch_embed_impl.1} parent=11 // pred_fallthru
        _
    $region12: #{_patch_embed_impl.1} parent=5 // pred_fallthru
      _
    %p155 = scmp.lt.s32.totalorder %s9, 8
    // Predicated region
    $region21: #{_patch_embed_impl.1} parent=5 // pred_check
      %p156 = pneg %p155
    $region22: #{_patch_embed_impl.1} parent=5 // pred_check_branch
      %158 = sbr.rel (%p156) target = $region24
    $region23: #{_patch_embed_impl.1} parent=5 // pred_region
      // Predicated region
      $region25: #{_patch_embed_impl.1} parent=23 // pred_check
        %p159 = pneg %p41
      $region26: #{_patch_embed_impl.1} parent=23 // pred_check_branch
        %161 = sbr.rel (%p159) target = $region28
      $region27: #{_patch_embed_impl.1} parent=23 // pred_region
        %s162 = smul.u32 2, %s17
        %p163 = scmp.lt.s32.totalorder %s162, 15
        %s164 = scalar_select %p163, %s162, 15
        %s165 = smul.addr %s164, 4
        %s166 = scalar_lea.vmem %s0, %s165
        %s167 = smul.u32 2, %s17
      $region28: #{_patch_embed_impl.1} parent=23 // pred_fallthru
        _
    $region24: #{_patch_embed_impl.1} parent=5 // pred_fallthru
      _
    %p168 = scmp.le.s32.totalorder 1, %s9
    %p169 = scmp.lt.s32.totalorder %s9, 9
    %p170 = pnand %p168, %p169
    %p171 = pneg %p170
    // Predicated region
    $region29: #{_patch_embed_impl.1} parent=5 // pred_check
      _
    $region30: #{_patch_embed_impl.1} parent=5 // pred_check_branch
      %173 = sbr.rel (%p170) target = $region32
    $region31: #{_patch_embed_impl.1} parent=5 // pred_region
      %s174 = ssub.s32 %s9, 1
      %s175 = smul.u32 2, %s19
      %p176 = scmp.lt.s32.totalorder %s175, 15
      %s177 = scalar_select %p176, %s175, 15
      %s178 = smul.addr %s177, 4
      %s179 = scalar_lea.vmem %s0, %s178
      %p180 = pneg %p47
      %p181 = pneg %p44
      %p182 = scmp.lt.s32.totalorder %s18, 0
      %s183 = scalar_select %p182, %s18, 0
      %s184 = smul.addr %s183, 4
      %s185 = scalar_lea.vmem %s1, %s184
      %p186 = pneg %p73
      %p187 = pneg %p70
      %p188 = scmp.lt.s32.totalorder %s18, 0
      %s189 = scalar_select %p188, %s18, 0
      %s190 = scalar_lea.vmem %s2, %s189
      %p191 = pneg %p99
      %p192 = pneg %p96
      %p193 = pneg %p127
      %p194 = pneg %p124
      %s195 = smul.u32 2, %s19
      %p196 = scmp.lt.s32.totalorder %s195, 15
      %s197 = scalar_select %p196, %s195, 15
      %p198 = scmp.lt.s32.totalorder %s18, 0
      %s199 = scalar_select %p198, %s18, 0
      %s200 = sadd.s32 %s199, %s197
      %s201 = smul.addr %s200, 8
      %s202 = scalar_lea.vmem %s3, %s201
      %s203 = smul.u32 2, %s19
      %p204 = scmp.lt.s32.totalorder %s203, 15
      %s205 = scalar_select %p204, %s203, 15
      %s206 = smul.addr %s205, 4
      %s207 = scalar_lea.vmem %s0, %s206
      %s208 = smul.u32 2, %s19
      %p209 = scmp.lt.s32.totalorder %s18, 0
      %s210 = scalar_select %p209, %s18, 0
      %s211 = smul.addr %s210, 4
      %s212 = scalar_lea.vmem %s1, %s211
      %p213 = scmp.lt.s32.totalorder %s18, 0
      %s214 = scalar_select %p213, %s18, 0
      %s215 = scalar_lea.vmem %s2, %s214
      %s216 = smul.u32 2, %s19
      %p217 = scmp.lt.s32.totalorder %s216, 15
      %s218 = scalar_select %p217, %s216, 15
      %p219 = scmp.lt.s32.totalorder %s18, 0
      %s220 = scalar_select %p219, %s18, 0
      %s221 = sadd.s32 %s220, %s218
      %s222 = smul.addr %s221, 8
      %s223 = scalar_lea.vmem %s3, %s222
      %s224 = smul.u32 2, %s19
      %v226 = vld [vmem:[%s207] sm:$0xf]
      %v227 = vld [vmem:[%s207 + $0x4] sm:$0xf]
      %v228 = vld [vmem:[%s212] sm:$0xf]
      %v229 = vld [vmem:[%s212 + $0x4] sm:$0xf]
      %v230 = vld [vmem:[%s212 + $0x8] sm:$0xf]
      %v231 = vld [vmem:[%s212 + $0xc] sm:$0xf]
      %v232 = vld [vmem:[%s212 + $0x10] sm:$0xf]
      %v233 = vld [vmem:[%s212 + $0x14] sm:$0xf]
      %v234 = vld [vmem:[%s212 + $0x18] sm:$0xf]
      %v235 = vld [vmem:[%s212 + $0x1c] sm:$0xf]
      %v236 = vld [vmem:[%s215] sm:$0x1]
      %v238 = vperm.slane %v236, 0
      %v242 = vunpack.c.l.b16 %v226
      %v243 = vunpack.c.l.b16 %v227
      %v244 = vpack.c.b16 %v243, %v242
      %v253 = vunpack.c.l.b16 %v228
      %v254 = vunpack.c.l.b16 %v229
      %v255 = vunpack.c.l.b16 %v230
      %v256 = vunpack.c.l.b16 %v231
      %v257 = vunpack.c.l.b16 %v232
      %v258 = vunpack.c.l.b16 %v233
      %v259 = vunpack.c.l.b16 %v234
      %v260 = vunpack.c.l.b16 %v235
      %v261 = vpack.c.b16 %v254, %v253
      %v262 = vpack.c.b16 %v256, %v255
      %v263 = vpack.c.b16 %v258, %v257
      %v264 = vpack.c.b16 %v260, %v259
      %vm269 = vcmask 523264
      %v271 = vsel %vm269, %v244, 0
      %273 = vmatpush.bf16.msra.mxu0 0
      %274 = vmatpush.bf16.msra.mxu0 0
      %275 = vmatpush.bf16.msra.mxu0 0
      %276 = vmatpush.bf16.msra.mxu0 0
      %277 = vmatpush.bf16.msra.mxu0 %v264
      %278 = vmatpush.bf16.msra.mxu0 %v263
      %279 = vmatpush.bf16.msra.mxu0 %v262
      %280 = vmatpush.bf16.msra.mxu0 %v261
      %281 = vmatmul.bf16.gmra.mxu0 %v271
      %v282 = vpop.f32.mrf.mxu0
      %v283 = vadd.f32 %v238, %v282
      %v284 = vpop.f32.mrf.mxu0
      %v285 = vadd.f32 %v238, %v284
      %286 = vdwg.mxu0
      %287 = vst [vmem:[%s223] sm:$0xff] %v283
      %288 = vst [vmem:[%s223 + $0x8] sm:$0xff] %v285
      %s289 = smul.u32 2, %s19
      %p290 = scmp.lt.s32.totalorder %s289, 15
      %s291 = scalar_select %p290, %s289, 15
      %p292 = scmp.lt.s32.totalorder %s18, 0
      %s293 = scalar_select %p292, %s18, 0
      %s294 = sadd.s32 %s293, %s291
      %s295 = smul.addr %s294, 8
      %s296 = scalar_lea.vmem %s3, %s295
      // Predicated region
      $region33: #{_patch_embed_impl.1} parent=31 // pred_check
        %p297 = pneg %p124
      $region34: #{_patch_embed_impl.1} parent=31 // pred_check_branch
        %299 = sbr.rel (%p297) target = $region36
      $region35: #{_patch_embed_impl.1} parent=31 // pred_region
        %s300 = smul.u32 2, %s19
      $region36: #{_patch_embed_impl.1} parent=31 // pred_fallthru
        _
    $region32: #{_patch_embed_impl.1} parent=5 // pred_fallthru
      _
    %p301 = scmp.le.s32.totalorder 2, %s9
    // Predicated region
    $region37: #{_patch_embed_impl.1} parent=5 // pred_check
      %p302 = pneg %p301
    $region38: #{_patch_embed_impl.1} parent=5 // pred_check_branch
      %304 = sbr.rel (%p302) target = $region40
    $region39: #{_patch_embed_impl.1} parent=5 // pred_region
      %s305 = ssub.s32 %s9, 2
      // Predicated region
      $region41: #{_patch_embed_impl.1} parent=39 // pred_check
        %p306 = pneg %p130
      $region42: #{_patch_embed_impl.1} parent=39 // pred_check_branch
        %308 = sbr.rel (%p306) target = $region44
      $region43: #{_patch_embed_impl.1} parent=39 // pred_region
        %s309 = smul.u32 2, %s21
        %p310 = scmp.lt.s32.totalorder %s309, 15
        %s311 = scalar_select %p310, %s309, 15
        %p312 = scmp.lt.s32.totalorder %s20, 0
        %s313 = scalar_select %p312, %s20, 0
        %s314 = sadd.s32 %s313, %s311
        %s315 = smul.addr %s314, 8
        %s316 = scalar_lea.vmem %s3, %s315
      $region44: #{_patch_embed_impl.1} parent=39 // pred_fallthru
        _
    $region40: #{_patch_embed_impl.1} parent=5 // pred_fallthru
      _
  $region6: #{_patch_embed_impl.1} parent=0 // loop_footer
    %s13 = sadd.s32 1, %s9
  $region7: #{_patch_embed_impl.1} parent=0 // loop_footer_branch
    %8 = sbr.rel target = $region3
  $region8: #{_patch_embed_impl.1} parent=0 // loop_exit
    _

</llo_original>
